<compile_context>
chip_gen: v7x
topology: tpu7x:2x2x1
jax: 0.10.0
libtpu: 0.0.40
codegen_flags: <defaults>
</compile_context>

<pallas_src>
import functools
import numpy as np
import jax
import jax.numpy as jnp
from jax import lax
from jax.experimental import pallas as pl
from jax.experimental.pallas import tpu as pltpu

NEG_SLOPE = 0.2        # GATConv default negative_slope
NEG_BIG = -1e30        # mask value for non-edges (finite; exp() == 0 in f32)
LANE = 128             # lane width / padded feature width
ONES_COL = 125         # constant-1 column -> softmax denominator via the MXU
A_SRC_COL = 126        # augmented-projection column holding <h_j, att_src>
A_DST_COL = 127        # augmented-projection column holding <h_i, att_dst>


def _round_up(x, m):
    return (x + m - 1) // m * m


def _fused_gat_kernel(x_ref, w1_ref, b1_ref, w2_ref, b2_ref, adj_ref, out_ref,
                      proj_scr, asrc_scr, h_scr, adst_scr, m_scr, acc_scr,
                      *, tq, tk, ncls):
    l = pl.program_id(0)          # 0 = conv1(+relu), 1 = conv2(+log_softmax)
    t = pl.program_id(1)          # destination-node tile
    s = pl.program_id(2)          # source-node block (online-softmax axis)
    n_s = pl.num_programs(2)
    first_step = jnp.logical_and(t == 0, s == 0)

    dst0 = pl.multiple_of(t * tq, tq)
    src0 = pl.multiple_of(s * tk, tk)

    def _store_layer_proj(projf):
        # f32 a_src row via one tiny selector matmul (once per layer).
        sel = (lax.broadcasted_iota(jnp.int32, (1, LANE), 1) == A_SRC_COL
               ).astype(jnp.float32)
        asrc_scr[...] = lax.dot_general(sel, projf, (((1,), (1,)), ((), ())),
                                        preferred_element_type=jnp.float32)
        # Plant a constant-1 column so `p @ proj` also yields sum_j p (the
        # softmax denominator) on the MXU.
        col = lax.broadcasted_iota(jnp.int32, projf.shape, 1)
        proj_scr[...] = jnp.where(col == ONES_COL, 1.0, projf
                                  ).astype(jnp.bfloat16)

    # ---- once per layer: augmented projection of ALL source nodes.
    @pl.when(jnp.logical_and(l == 0, first_step))
    def _():
        _store_layer_proj(jnp.dot(x_ref[...], w1_ref[...],
                                  preferred_element_type=jnp.float32))

    @pl.when(jnp.logical_and(l == 1, first_step))
    def _():
        _store_layer_proj(jnp.dot(h_scr[...], w2_ref[...],
                                  preferred_element_type=jnp.float32))

    # ---- once per destination tile: reset running stats, cache a_dst column.
    @pl.when(s == 0)
    def _():
        m_scr[...] = jnp.full_like(m_scr, NEG_BIG)
        acc_scr[...] = jnp.zeros_like(acc_scr)
        dtile = proj_scr[pl.ds(dst0, tq), :]
        adst_scr[...] = dtile[:, A_DST_COL:A_DST_COL + 1].astype(jnp.float32)

    # ---- per (dest tile, source block): online masked-softmax attention.
    if tk == asrc_scr.shape[1]:            # single source block (trace-time)
        a_src = asrc_scr[...]
    else:
        a_src = asrc_scr[:, pl.ds(src0, tk)]          # [1, tk] f32
    a_dst = adst_scr[...]                              # [tq, 1] f32

    logits = a_dst + a_src                             # [tq, tk]
    logits = jnp.maximum(logits, NEG_SLOPE * logits)   # leaky ReLU
    masked = jnp.where(adj_ref[...] != 0, logits, NEG_BIG)   # int8 compare
    m_new = jnp.maximum(m_scr[...], jnp.max(masked, axis=-1, keepdims=True))
    corr = jnp.exp(m_scr[...] - m_new)
    # exp(NEG_BIG - m_new) underflows to 0 for any realistic finite m_new;
    # rows whose running max is still NEG_BIG are wiped by corr == 0 at the
    # first block containing a real edge (self-loops guarantee one exists).
    p = jnp.exp(masked - m_new)                        # unnormalized weights
    proj_blk = proj_scr[pl.ds(src0, tk), :]            # [tk, 128] bf16
    acc_scr[...] = corr * acc_scr[...] + jnp.dot(
        p.astype(jnp.bfloat16), proj_blk, preferred_element_type=jnp.float32)
    m_scr[...] = m_new

    def _normalized():
        denom = jnp.maximum(acc_scr[:, ONES_COL:ONES_COL + 1], 1e-30)
        return acc_scr[...] * pl.reciprocal(denom, approx=True)

    last_s = s == n_s - 1

    @pl.when(jnp.logical_and(last_s, l == 0))
    def _():
        h = jnp.maximum(_normalized() + b1_ref[...], 0.0)   # bias + ReLU
        h_scr[pl.ds(dst0, tq), :] = h.astype(jnp.bfloat16)
        out_ref[...] = h    # deterministic filler; overwritten in layer 1

    @pl.when(jnp.logical_and(last_s, l == 1))
    def _():
        o = _normalized() + b2_ref[...]
        colc = lax.broadcasted_iota(jnp.int32, (tq, LANE), 1)
        valid = colc < ncls                                  # real class cols
        mx = jnp.max(jnp.where(valid, o, NEG_BIG), axis=-1, keepdims=True)
        z = o - mx
        ez = jnp.where(valid, jnp.exp(z), 0.0)
        out_ref[...] = z - jnp.log(jnp.sum(ez, axis=-1, keepdims=True))


def _vmem_limit_bytes(n_pad, fin, tq, tk):
    resident = (
        2 * n_pad * fin * 2          # x (bf16, double-buffered, resident)
        + 2 * fin * LANE * 2         # W1_aug
        + 2 * LANE * LANE * 2        # W2_aug
        + 2 * 2 * LANE * 4           # biases
        + 2 * tq * tk                # adjacency block (int8, double-buffered)
        + 2 * tq * LANE * 4          # output block (double-buffered)
        + 2 * n_pad * LANE * 2       # proj_scr + h_scr (bf16)
        + 8 * n_pad * 4              # a_src row (sublane-padded)
        + 2 * tq * LANE * 4          # adst_scr + m_scr (lane-padded)
        + tq * LANE * 4              # acc_scr
        + 4 * tq * tk * 4            # live softmax temporaries
        + n_pad * LANE * 4           # init-time f32 projection temporary
    )
    return int(min(max(2 * resident, 32 * 2**20), 64 * 2**20))


def gat_forward(params, x, adj_pad, *, n, ncls, tq, tk):
    """adj_pad: [N_pad, N_pad] int8, adj_pad[i, j] = 1 iff edge j -> i,
    with self-loops on EVERY row (including padded rows) -- required."""
    n_pad = adj_pad.shape[0]
    fin = x.shape[1]
    hid = params["w1"].shape[1]
    assert hid < ONES_COL and ncls < ONES_COL
    assert n_pad % tq == 0 and n_pad % tk == 0
    assert tq % 16 == 0 and tk % 16 == 0

    def aug(w, a_src, a_dst, k):
        fi, fo = w.shape
        wa = jnp.zeros((k, LANE), jnp.float32)
        wa = wa.at[:fi, :fo].set(w)
        wa = wa.at[:fi, A_SRC_COL].set((w @ a_src.T)[:, 0])
        wa = wa.at[:fi, A_DST_COL].set((w @ a_dst.T)[:, 0])
        return wa.astype(jnp.bfloat16)

    w1a = aug(params["w1"], params["asrc1"], params["adst1"], fin)
    w2a = aug(params["w2"], params["asrc2"], params["adst2"], LANE)
    b1 = jnp.zeros((1, LANE), jnp.float32).at[:, :hid].set(params["b1"])
    b2 = jnp.zeros((1, LANE), jnp.float32).at[:, :ncls].set(params["b2"])
    x_pad = jnp.zeros((n_pad, fin), jnp.bfloat16).at[:n, :].set(
        x.astype(jnp.bfloat16))

    kernel = functools.partial(_fused_gat_kernel, tq=tq, tk=tk, ncls=ncls)
    out = pl.pallas_call(
        kernel,
        out_shape=jax.ShapeDtypeStruct((n_pad, LANE), jnp.float32),
        grid_spec=pltpu.PrefetchScalarGridSpec(
            num_scalar_prefetch=0,
            grid=(2, n_pad // tq, n_pad // tk),     # (layer, dest tile, src blk)
            in_specs=[
                pl.BlockSpec((n_pad, fin), lambda l, t, s: (0, 0)),   # x (bf16)
                pl.BlockSpec((fin, LANE), lambda l, t, s: (0, 0)),    # W1_aug
                pl.BlockSpec((1, LANE), lambda l, t, s: (0, 0)),      # b1
                pl.BlockSpec((LANE, LANE), lambda l, t, s: (0, 0)),   # W2_aug
                pl.BlockSpec((1, LANE), lambda l, t, s: (0, 0)),      # b2
                pl.BlockSpec((tq, tk), lambda l, t, s: (t, s)),       # adj int8
            ],
            out_specs=pl.BlockSpec((tq, LANE), lambda l, t, s: (t, 0)),
            scratch_shapes=[
                pltpu.VMEM((n_pad, LANE), jnp.bfloat16),  # augmented projection
                pltpu.VMEM((1, n_pad), jnp.float32),      # a_src row (f32)
                pltpu.VMEM((n_pad, LANE), jnp.bfloat16),  # layer-1 output h
                pltpu.VMEM((tq, 1), jnp.float32),         # a_dst column (tile)
                pltpu.VMEM((tq, 1), jnp.float32),         # running row max
                pltpu.VMEM((tq, LANE), jnp.float32),      # online-softmax acc
            ]),
        compiler_params=pltpu.CompilerParams(
            dimension_semantics=("arbitrary", "arbitrary", "arbitrary"),
            vmem_limit_bytes=_vmem_limit_bytes(n_pad, fin, tq, tk)),
    )(x_pad, w1a, b1, w2a, b2, adj_pad)
    return out[:n, :ncls]


def _reference(params, x, edge_index, n):
    """Pure-JAX f32 reference of the PyTorch module in eval mode."""
    adj = np.zeros((n, n), np.float32)
    adj[np.asarray(edge_index[1]), np.asarray(edge_index[0])] = 1.0
    adj[np.arange(n), np.arange(n)] = 1.0
    adj = jnp.asarray(adj)

    def layer(h_in, w, b, asrc, adst):
        h = h_in @ w
        e_src = jnp.sum(h * asrc, axis=-1)
        e_dst = jnp.sum(h * adst, axis=-1)
        logits = e_dst[:, None] + e_src[None, :]
        logits = jnp.where(logits > 0, logits, NEG_SLOPE * logits)
        logits = jnp.where(adj > 0, logits, -jnp.inf)
        alpha = jax.nn.softmax(logits, axis=-1)
        return alpha @ h + b

    h = jax.nn.relu(layer(x, params["w1"], params["b1"],
                          params["asrc1"], params["adst1"]))
    o = layer(h, params["w2"], params["b2"], params["asrc2"], params["adst2"])
    return jax.nn.log_softmax(o, axis=-1)


if __name__ == "__main__":
    N, F_IN, HID, NCLS = 16, 8, 16, 4

    key = jax.random.PRNGKey(0)
    ks = jax.random.split(key, 8)
    x = jax.random.normal(ks[0], (N, F_IN), jnp.float32)

    # deterministic ring graph: i <-> (i+1) % N ; edge_index is [2, E] (src, dst)
    src = np.concatenate([np.arange(N), (np.arange(N) + 1) % N])
    dst = np.concatenate([(np.arange(N) + 1) % N, np.arange(N)])
    edge_index = np.stack([src, dst]).astype(np.int32)          # [2, 32]

    # tile sizing: single tile for small graphs; source-blocked for large ones.
    if N <= 256:
        n_pad = _round_up(N, 16)
        tq = tk = n_pad
    else:
        tq, tk = 128, 512   # v6e/v5e (128 MiB VMEM) may raise tq to 256
        n_pad = _round_up(N, 512)

    adj = np.zeros((n_pad, n_pad), np.int8)
    adj[edge_index[1], edge_index[0]] = 1                 # adj[dst, src]
    adj[np.arange(n_pad), np.arange(n_pad)] = 1           # self-loops (all rows)
    adj = jnp.asarray(adj)

    def glorot(k, shape):
        lim = float(np.sqrt(6.0 / (shape[0] + shape[1])))
        return jax.random.uniform(k, shape, jnp.float32, -lim, lim)

    params = dict(
        w1=glorot(ks[1], (F_IN, HID)),        # conv1.lin.weight^T
        asrc1=glorot(ks[2], (1, HID)),        # conv1.att_src (heads=1)
        adst1=glorot(ks[3], (1, HID)),        # conv1.att_dst
        b1=jnp.zeros((1, HID), jnp.float32),  # conv1.bias
        w2=glorot(ks[4], (HID, NCLS)),
        asrc2=glorot(ks[5], (1, NCLS)),
        adst2=glorot(ks[6], (1, NCLS)),
        b2=jnp.zeros((1, NCLS), jnp.float32),
    )

    fwd = jax.jit(functools.partial(gat_forward, n=N, ncls=NCLS, tq=tq, tk=tk))
    out = fwd(params, x, adj)
    jax.block_until_ready(out)
    assert out.shape == (N, NCLS)
    assert bool(jnp.all(jnp.isfinite(out)))

    # bf16 operands + approx reciprocal => compare with a loose tolerance.
    ref = _reference(params, x, edge_index, N)
    assert float(jnp.max(jnp.abs(out - ref))) < 0.15
    print("KERNEL_OK")
</pallas_src>

<mosaic_0001>
module attributes {stable_mosaic.version = 11 : i64} {
  func.func @_fused_gat_kernel(%arg0: i32, %arg1: i32, %arg2: i32, %arg3: memref<16x8xbf16, #tpu.memory_space<vmem>>, %arg4: memref<8x128xbf16, #tpu.memory_space<vmem>>, %arg5: memref<1x128xf32, #tpu.memory_space<vmem>>, %arg6: memref<128x128xbf16, #tpu.memory_space<vmem>>, %arg7: memref<1x128xf32, #tpu.memory_space<vmem>>, %arg8: memref<16x16xi8, #tpu.memory_space<vmem>>, %arg9: memref<16x128xf32, #tpu.memory_space<vmem>>, %arg10: memref<16x128xbf16, #tpu.memory_space<vmem>>, %arg11: memref<1x16xf32, #tpu.memory_space<vmem>>, %arg12: memref<16x128xbf16, #tpu.memory_space<vmem>>, %arg13: memref<16x1xf32, #tpu.memory_space<vmem>>, %arg14: memref<16x1xf32, #tpu.memory_space<vmem>>, %arg15: memref<16x128xf32, #tpu.memory_space<vmem>>) attributes {dimension_semantics = [#tpu.dimension_semantics<arbitrary>, #tpu.dimension_semantics<arbitrary>, #tpu.dimension_semantics<arbitrary>], iteration_bounds = array<i64: 2, 1, 1>, scalar_prefetch = 0 : i64, scratch_operands = 6 : i64, tpu.core_type = #tpu.core_type<tc>, window_params = [{pipeline_mode = #tpu.pipeline_mode<synchronous>, transform_indices = @transform_0, window_bounds = array<i64: 16, 8>}, {pipeline_mode = #tpu.pipeline_mode<synchronous>, transform_indices = @transform_1, window_bounds = array<i64: 8, 128>}, {pipeline_mode = #tpu.pipeline_mode<synchronous>, transform_indices = @transform_2, window_bounds = array<i64: 1, 128>}, {pipeline_mode = #tpu.pipeline_mode<synchronous>, transform_indices = @transform_3, window_bounds = array<i64: 128, 128>}, {pipeline_mode = #tpu.pipeline_mode<synchronous>, transform_indices = @transform_4, window_bounds = array<i64: 1, 128>}, {transform_indices = @transform_5, window_bounds = array<i64: 16, 16>}, {transform_indices = @transform_6, window_bounds = array<i64: 16, 128>}]} {
    %c0_i32 = arith.constant 0 : i32
    %0 = arith.cmpi eq, %arg1, %c0_i32 : i32
    %c0_i32_0 = arith.constant 0 : i32
    %1 = arith.cmpi eq, %arg2, %c0_i32_0 : i32
    %2 = arith.andi %0, %1 : i1
    %c16_i32 = arith.constant 16 : i32
    %3 = arith.muli %arg1, %c16_i32 : i32
    %4 = tpu.assume_multiple %3, 16 : i32
    %c16_i32_1 = arith.constant 16 : i32
    %5 = arith.muli %arg2, %c16_i32_1 : i32
    %6 = tpu.assume_multiple %5, 16 : i32
    %c0_i32_2 = arith.constant 0 : i32
    %7 = arith.cmpi eq, %arg0, %c0_i32_2 : i32
    %8 = arith.andi %7, %2 : i1
    %9 = arith.extui %8 : i1 to i32
    %c0_i32_3 = arith.constant 0 : i32
    %10 = arith.cmpi ne, %9, %c0_i32_3 : i32
    scf.if %10 {
      %c0_31 = arith.constant 0 : index
      %c0_32 = arith.constant 0 : index
      %60 = vector.load %arg3[%c0_31, %c0_32] : memref<16x8xbf16, #tpu.memory_space<vmem>>, vector<16x8xbf16>
      %c0_33 = arith.constant 0 : index
      %c0_34 = arith.constant 0 : index
      %61 = vector.load %arg4[%c0_33, %c0_34] : memref<8x128xbf16, #tpu.memory_space<vmem>>, vector<8x128xbf16>
      %cst_35 = arith.constant dense<0.000000e+00> : vector<16x128xf32>
      %62 = tpu.matmul %60, %61, %cst_35 {dimension_numbers = #tpu.dot_dimension_numbers<[1], [0], [0], [1], [0, 0, 1, 1], [], []>} : vector<16x8xbf16>, vector<8x128xbf16>, vector<16x128xf32> -> vector<16x128xf32>
      %63 = tpu.iota {dimensions = array<i32: 1>} : vector<1x128xi32>
      %c126_i32 = arith.constant 126 : i32
      %64 = vector.broadcast %c126_i32 : i32 to vector<1x128xi32>
      %65 = arith.cmpi eq, %63, %64 : vector<1x128xi32>
      %66 = arith.extui %65 : vector<1x128xi1> to vector<1x128xi32>
      %67 = arith.sitofp %66 : vector<1x128xi32> to vector<1x128xf32>
      %cst_36 = arith.constant dense<0.000000e+00> : vector<1x16xf32>
      %68 = tpu.matmul %67, %62, %cst_36 {dimension_numbers = #tpu.dot_dimension_numbers<[1], [1], [0], [0], [0, 0, 1, 0], [], []>} : vector<1x128xf32>, vector<16x128xf32>, vector<1x16xf32> -> vector<1x16xf32>
      %c0_37 = arith.constant 0 : index
      %c0_38 = arith.constant 0 : index
      %69 = vector.load %arg11[%c0_37, %c0_38] : memref<1x16xf32, #tpu.memory_space<vmem>>, vector<1x16xf32>
      tpu.vector_store %arg11[%c0_37, %c0_38], %68 {strides = array<i32>} : memref<1x16xf32, #tpu.memory_space<vmem>>, vector<1x16xf32>,
      %70 = tpu.iota {dimensions = array<i32: 1>} : vector<16x128xi32>
      %c125_i32 = arith.constant 125 : i32
      %71 = vector.broadcast %c125_i32 : i32 to vector<16x128xi32>
      %72 = arith.cmpi eq, %70, %71 : vector<16x128xi32>
      %cst_39 = arith.constant 1.000000e+00 : f32
      %73 = vector.broadcast %cst_39 : f32 to vector<16x128xf32>
      %74 = arith.select %72, %73, %62 : vector<16x128xi1>, vector<16x128xf32>
      %75 = arith.truncf %74 : vector<16x128xf32> to vector<16x128xbf16>
      %c0_40 = arith.constant 0 : index
      %c0_41 = arith.constant 0 : index
      %76 = vector.load %arg10[%c0_40, %c0_41] : memref<16x128xbf16, #tpu.memory_space<vmem>>, vector<16x128xbf16>
      tpu.vector_store %arg10[%c0_40, %c0_41], %75 {strides = array<i32>} : memref<16x128xbf16, #tpu.memory_space<vmem>>, vector<16x128xbf16>,
    } else {
    }
    %c1_i32 = arith.constant 1 : i32
    %11 = arith.cmpi eq, %arg0, %c1_i32 : i32
    %12 = arith.andi %11, %2 : i1
    %13 = arith.extui %12 : i1 to i32
    %c0_i32_4 = arith.constant 0 : i32
    %14 = arith.cmpi ne, %13, %c0_i32_4 : i32
    scf.if %14 {
      %c0_31 = arith.constant 0 : index
      %c0_32 = arith.constant 0 : index
      %60 = vector.load %arg12[%c0_31, %c0_32] : memref<16x128xbf16, #tpu.memory_space<vmem>>, vector<16x128xbf16>
      %c0_33 = arith.constant 0 : index
      %c0_34 = arith.constant 0 : index
      %61 = vector.load %arg6[%c0_33, %c0_34] : memref<128x128xbf16, #tpu.memory_space<vmem>>, vector<128x128xbf16>
      %cst_35 = arith.constant dense<0.000000e+00> : vector<16x128xf32>
      %62 = tpu.matmul %60, %61, %cst_35 {dimension_numbers = #tpu.dot_dimension_numbers<[1], [0], [0], [1], [0, 0, 1, 1], [], []>} : vector<16x128xbf16>, vector<128x128xbf16>, vector<16x128xf32> -> vector<16x128xf32>
      %63 = tpu.iota {dimensions = array<i32: 1>} : vector<1x128xi32>
      %c126_i32 = arith.constant 126 : i32
      %64 = vector.broadcast %c126_i32 : i32 to vector<1x128xi32>
      %65 = arith.cmpi eq, %63, %64 : vector<1x128xi32>
      %66 = arith.extui %65 : vector<1x128xi1> to vector<1x128xi32>
      %67 = arith.sitofp %66 : vector<1x128xi32> to vector<1x128xf32>
      %cst_36 = arith.constant dense<0.000000e+00> : vector<1x16xf32>
      %68 = tpu.matmul %67, %62, %cst_36 {dimension_numbers = #tpu.dot_dimension_numbers<[1], [1], [0], [0], [0, 0, 1, 0], [], []>} : vector<1x128xf32>, vector<16x128xf32>, vector<1x16xf32> -> vector<1x16xf32>
      %c0_37 = arith.constant 0 : index
      %c0_38 = arith.constant 0 : index
      %69 = vector.load %arg11[%c0_37, %c0_38] : memref<1x16xf32, #tpu.memory_space<vmem>>, vector<1x16xf32>
      tpu.vector_store %arg11[%c0_37, %c0_38], %68 {strides = array<i32>} : memref<1x16xf32, #tpu.memory_space<vmem>>, vector<1x16xf32>,
      %70 = tpu.iota {dimensions = array<i32: 1>} : vector<16x128xi32>
      %c125_i32 = arith.constant 125 : i32
      %71 = vector.broadcast %c125_i32 : i32 to vector<16x128xi32>
      %72 = arith.cmpi eq, %70, %71 : vector<16x128xi32>
      %cst_39 = arith.constant 1.000000e+00 : f32
      %73 = vector.broadcast %cst_39 : f32 to vector<16x128xf32>
      %74 = arith.select %72, %73, %62 : vector<16x128xi1>, vector<16x128xf32>
      %75 = arith.truncf %74 : vector<16x128xf32> to vector<16x128xbf16>
      %c0_40 = arith.constant 0 : index
      %c0_41 = arith.constant 0 : index
      %76 = vector.load %arg10[%c0_40, %c0_41] : memref<16x128xbf16, #tpu.memory_space<vmem>>, vector<16x128xbf16>
      tpu.vector_store %arg10[%c0_40, %c0_41], %75 {strides = array<i32>} : memref<16x128xbf16, #tpu.memory_space<vmem>>, vector<16x128xbf16>,
    } else {
    }
    %c0_i32_5 = arith.constant 0 : i32
    %15 = arith.cmpi eq, %arg2, %c0_i32_5 : i32
    %16 = arith.extui %15 : i1 to i32
    %c0_i32_6 = arith.constant 0 : i32
    %17 = arith.cmpi ne, %16, %c0_i32_6 : i32
    scf.if %17 {
      %cst_31 = arith.constant -1.000000e+30 : f32
      %60 = vector.broadcast %cst_31 : f32 to vector<16x1xf32>
      %c0_32 = arith.constant 0 : index
      %c0_33 = arith.constant 0 : index
      %61 = vector.load %arg14[%c0_32, %c0_33] : memref<16x1xf32, #tpu.memory_space<vmem>>, vector<16x1xf32>
      tpu.vector_store %arg14[%c0_32, %c0_33], %60 {strides = array<i32>} : memref<16x1xf32, #tpu.memory_space<vmem>>, vector<16x1xf32>,
      %cst_34 = arith.constant 0.000000e+00 : f32
      %62 = vector.broadcast %cst_34 : f32 to vector<16x128xf32>
      %c0_35 = arith.constant 0 : index
      %c0_36 = arith.constant 0 : index
      %63 = vector.load %arg15[%c0_35, %c0_36] : memref<16x128xf32, #tpu.memory_space<vmem>>, vector<16x128xf32>
      tpu.vector_store %arg15[%c0_35, %c0_36], %62 {strides = array<i32>} : memref<16x128xf32, #tpu.memory_space<vmem>>, vector<16x128xf32>,
      %64 = arith.index_cast %4 : i32 to index
      %c0_37 = arith.constant 0 : index
      %65 = vector.load %arg10[%64, %c0_37] : memref<16x128xbf16, #tpu.memory_space<vmem>>, vector<16x128xbf16>
      %66 = vector.extract_strided_slice %65 {offsets = [0, 127], sizes = [16, 1], strides = [1, 1]} : vector<16x128xbf16> to vector<16x1xbf16>
      %67 = arith.extf %66 : vector<16x1xbf16> to vector<16x1xf32>
      %c0_38 = arith.constant 0 : index
      %c0_39 = arith.constant 0 : index
      %68 = vector.load %arg13[%c0_38, %c0_39] : memref<16x1xf32, #tpu.memory_space<vmem>>, vector<16x1xf32>
      tpu.vector_store %arg13[%c0_38, %c0_39], %67 {strides = array<i32>} : memref<16x1xf32, #tpu.memory_space<vmem>>, vector<16x1xf32>,
    } else {
    }
    %c0 = arith.constant 0 : index
    %c0_7 = arith.constant 0 : index
    %18 = vector.load %arg11[%c0, %c0_7] : memref<1x16xf32, #tpu.memory_space<vmem>>, vector<1x16xf32>
    %c0_8 = arith.constant 0 : index
    %c0_9 = arith.constant 0 : index
    %19 = vector.load %arg13[%c0_8, %c0_9] : memref<16x1xf32, #tpu.memory_space<vmem>>, vector<16x1xf32>
    %20 = vector.broadcast %19 : vector<16x1xf32> to vector<16x16xf32>
    %21 = vector.broadcast %18 : vector<1x16xf32> to vector<16x16xf32>
    %22 = arith.addf %20, %21 : vector<16x16xf32>
    %cst = arith.constant 2.000000e-01 : f32
    %23 = vector.broadcast %cst : f32 to vector<16x16xf32>
    %24 = arith.mulf %23, %22 : vector<16x16xf32>
    %25 = arith.maximumf %22, %24 : vector<16x16xf32>
    %c0_10 = arith.constant 0 : index
    %c0_11 = arith.constant 0 : index
    %26 = vector.load %arg8[%c0_10, %c0_11] : memref<16x16xi8, #tpu.memory_space<vmem>>, vector<16x16xi8>
    %c0_i8 = arith.constant 0 : i8
    %27 = vector.broadcast %c0_i8 : i8 to vector<16x16xi8>
    %28 = arith.cmpi ne, %26, %27 : vector<16x16xi8>
    %cst_12 = arith.constant -1.000000e+30 : f32
    %29 = vector.broadcast %cst_12 : f32 to vector<16x16xf32>
    %30 = arith.select %28, %25, %29 : vector<16x16xi1>, vector<16x16xf32>
    %c0_13 = arith.constant 0 : index
    %c0_14 = arith.constant 0 : index
    %31 = vector.load %arg14[%c0_13, %c0_14] : memref<16x1xf32, #tpu.memory_space<vmem>>, vector<16x1xf32>
    %cst_15 = arith.constant dense<0xFF800000> : vector<16xf32>
    %32 = vector.multi_reduction <maximumf>, %30, %cst_15 [1] : vector<16x16xf32> to vector<16xf32>
    %33 = vector.shape_cast %32 : vector<16xf32> to vector<16x1xf32>
    %34 = arith.maximumf %31, %33 : vector<16x1xf32>
    %c0_16 = arith.constant 0 : index
    %c0_17 = arith.constant 0 : index
    %35 = vector.load %arg14[%c0_16, %c0_17] : memref<16x1xf32, #tpu.memory_space<vmem>>, vector<16x1xf32>
    %36 = arith.subf %35, %34 : vector<16x1xf32>
    %37 = math.exp %36 : vector<16x1xf32>
    %38 = vector.broadcast %34 : vector<16x1xf32> to vector<16x16xf32>
    %39 = arith.subf %30, %38 : vector<16x16xf32>
    %40 = math.exp %39 : vector<16x16xf32>
    %41 = arith.index_cast %6 : i32 to index
    %c0_18 = arith.constant 0 : index
    %42 = vector.load %arg10[%41, %c0_18] : memref<16x128xbf16, #tpu.memory_space<vmem>>, vector<16x128xbf16>
    %c0_19 = arith.constant 0 : index
    %c0_20 = arith.constant 0 : index
    %43 = vector.load %arg15[%c0_19, %c0_20] : memref<16x128xf32, #tpu.memory_space<vmem>>, vector<16x128xf32>
    %44 = vector.broadcast %37 : vector<16x1xf32> to vector<16x128xf32>
    %45 = arith.mulf %44, %43 : vector<16x128xf32>
    %46 = arith.truncf %40 : vector<16x16xf32> to vector<16x16xbf16>
    %cst_21 = arith.constant dense<0.000000e+00> : vector<16x128xf32>
    %47 = tpu.matmul %46, %42, %cst_21 {dimension_numbers = #tpu.dot_dimension_numbers<[1], [0], [0], [1], [0, 0, 1, 1], [], []>} : vector<16x16xbf16>, vector<16x128xbf16>, vector<16x128xf32> -> vector<16x128xf32>
    %48 = arith.addf %45, %47 : vector<16x128xf32>
    %c0_22 = arith.constant 0 : index
    %c0_23 = arith.constant 0 : index
    %49 = vector.load %arg15[%c0_22, %c0_23] : memref<16x128xf32, #tpu.memory_space<vmem>>, vector<16x128xf32>
    tpu.vector_store %arg15[%c0_22, %c0_23], %48 {strides = array<i32>} : memref<16x128xf32, #tpu.memory_space<vmem>>, vector<16x128xf32>,
    %c0_24 = arith.constant 0 : index
    %c0_25 = arith.constant 0 : index
    %50 = vector.load %arg14[%c0_24, %c0_25] : memref<16x1xf32, #tpu.memory_space<vmem>>, vector<16x1xf32>
    tpu.vector_store %arg14[%c0_24, %c0_25], %34 {strides = array<i32>} : memref<16x1xf32, #tpu.memory_space<vmem>>, vector<16x1xf32>,
    %c0_i32_26 = arith.constant 0 : i32
    %51 = arith.cmpi eq, %arg2, %c0_i32_26 : i32
    %c0_i32_27 = arith.constant 0 : i32
    %52 = arith.cmpi eq, %arg0, %c0_i32_27 : i32
    %53 = arith.andi %51, %52 : i1
    %54 = arith.extui %53 : i1 to i32
    %c0_i32_28 = arith.constant 0 : i32
    %55 = arith.cmpi ne, %54, %c0_i32_28 : i32
    scf.if %55 {
      %c0_31 = arith.constant 0 : index
      %c125 = arith.constant 125 : index
      %60 = vector.load %arg15[%c0_31, %c125] : memref<16x128xf32, #tpu.memory_space<vmem>>, vector<16x1xf32>
      %cst_32 = arith.constant 1.000000e-30 : f32
      %61 = vector.broadcast %cst_32 : f32 to vector<16x1xf32>
      %62 = arith.maximumf %60, %61 : vector<16x1xf32>
      %c0_33 = arith.constant 0 : index
      %c0_34 = arith.constant 0 : index
      %63 = vector.load %arg15[%c0_33, %c0_34] : memref<16x128xf32, #tpu.memory_space<vmem>>, vector<16x128xf32>
      %64 = tpu.reciprocal %62 {approx = true} : vector<16x1xf32> -> vector<16x1xf32>
      %65 = vector.broadcast %64 : vector<16x1xf32> to vector<16x128xf32>
      %66 = arith.mulf %63, %65 : vector<16x128xf32>
      %c0_35 = arith.constant 0 : index
      %c0_36 = arith.constant 0 : index
      %67 = vector.load %arg5[%c0_35, %c0_36] : memref<1x128xf32, #tpu.memory_space<vmem>>, vector<1x128xf32>
      %68 = vector.broadcast %67 : vector<1x128xf32> to vector<16x128xf32>
      %69 = arith.addf %66, %68 : vector<16x128xf32>
      %cst_37 = arith.constant 0.000000e+00 : f32
      %70 = vector.broadcast %cst_37 : f32 to vector<16x128xf32>
      %71 = arith.maximumf %69, %70 : vector<16x128xf32>
      %72 = arith.truncf %71 : vector<16x128xf32> to vector<16x128xbf16>
      %73 = arith.index_cast %4 : i32 to index
      %c0_38 = arith.constant 0 : index
      %74 = vector.load %arg12[%73, %c0_38] : memref<16x128xbf16, #tpu.memory_space<vmem>>, vector<16x128xbf16>
      tpu.vector_store %arg12[%73, %c0_38], %72 {strides = array<i32>} : memref<16x128xbf16, #tpu.memory_space<vmem>>, vector<16x128xbf16>,
      %c0_39 = arith.constant 0 : index
      %c0_40 = arith.constant 0 : index
      %75 = vector.load %arg9[%c0_39, %c0_40] : memref<16x128xf32, #tpu.memory_space<vmem>>, vector<16x128xf32>
      tpu.vector_store %arg9[%c0_39, %c0_40], %71 {strides = array<i32>} : memref<16x128xf32, #tpu.memory_space<vmem>>, vector<16x128xf32>,
    } else {
    }
    %c1_i32_29 = arith.constant 1 : i32
    %56 = arith.cmpi eq, %arg0, %c1_i32_29 : i32
    %57 = arith.andi %51, %56 : i1
    %58 = arith.extui %57 : i1 to i32
    %c0_i32_30 = arith.constant 0 : i32
    %59 = arith.cmpi ne, %58, %c0_i32_30 : i32
    scf.if %59 {
      %c0_31 = arith.constant 0 : index
      %c125 = arith.constant 125 : index
      %60 = vector.load %arg15[%c0_31, %c125] : memref<16x128xf32, #tpu.memory_space<vmem>>, vector<16x1xf32>
      %cst_32 = arith.constant 1.000000e-30 : f32
      %61 = vector.broadcast %cst_32 : f32 to vector<16x1xf32>
      %62 = arith.maximumf %60, %61 : vector<16x1xf32>
      %c0_33 = arith.constant 0 : index
      %c0_34 = arith.constant 0 : index
      %63 = vector.load %arg15[%c0_33, %c0_34] : memref<16x128xf32, #tpu.memory_space<vmem>>, vector<16x128xf32>
      %64 = tpu.reciprocal %62 {approx = true} : vector<16x1xf32> -> vector<16x1xf32>
      %65 = vector.broadcast %64 : vector<16x1xf32> to vector<16x128xf32>
      %66 = arith.mulf %63, %65 : vector<16x128xf32>
      %c0_35 = arith.constant 0 : index
      %c0_36 = arith.constant 0 : index
      %67 = vector.load %arg7[%c0_35, %c0_36] : memref<1x128xf32, #tpu.memory_space<vmem>>, vector<1x128xf32>
      %68 = vector.broadcast %67 : vector<1x128xf32> to vector<16x128xf32>
      %69 = arith.addf %66, %68 : vector<16x128xf32>
      %70 = tpu.iota {dimensions = array<i32: 1>} : vector<16x128xi32>
      %c4_i32 = arith.constant 4 : i32
      %71 = vector.broadcast %c4_i32 : i32 to vector<16x128xi32>
      %72 = arith.cmpi slt, %70, %71 : vector<16x128xi32>
      %cst_37 = arith.constant -1.000000e+30 : f32
      %73 = vector.broadcast %cst_37 : f32 to vector<16x128xf32>
      %74 = arith.select %72, %69, %73 : vector<16x128xi1>, vector<16x128xf32>
      %cst_38 = arith.constant dense<0xFF800000> : vector<16xf32>
      %75 = vector.multi_reduction <maximumf>, %74, %cst_38 [1] : vector<16x128xf32> to vector<16xf32>
      %76 = vector.shape_cast %75 : vector<16xf32> to vector<16x1xf32>
      %77 = vector.broadcast %76 : vector<16x1xf32> to vector<16x128xf32>
      %78 = arith.subf %69, %77 : vector<16x128xf32>
      %79 = math.exp %78 : vector<16x128xf32>
      %cst_39 = arith.constant 0.000000e+00 : f32
      %80 = vector.broadcast %cst_39 : f32 to vector<16x128xf32>
      %81 = arith.select %72, %79, %80 : vector<16x128xi1>, vector<16x128xf32>
      %cst_40 = arith.constant dense<0.000000e+00> : vector<16xf32>
      %82 = vector.multi_reduction <add>, %81, %cst_40 [1] : vector<16x128xf32> to vector<16xf32>
      %83 = vector.shape_cast %82 : vector<16xf32> to vector<16x1xf32>
      %84 = math.log %83 : vector<16x1xf32>
      %85 = vector.broadcast %84 : vector<16x1xf32> to vector<16x128xf32>
      %86 = arith.subf %78, %85 : vector<16x128xf32>
      %c0_41 = arith.constant 0 : index
      %c0_42 = arith.constant 0 : index
      %87 = vector.load %arg9[%c0_41, %c0_42] : memref<16x128xf32, #tpu.memory_space<vmem>>, vector<16x128xf32>
      tpu.vector_store %arg9[%c0_41, %c0_42], %86 {strides = array<i32>} : memref<16x128xf32, #tpu.memory_space<vmem>>, vector<16x128xf32>,
    } else {
    }
    return
  }
  func.func @transform_0(%arg0: i32, %arg1: i32, %arg2: i32) -> (i32, i32) {
    %c0_i32 = arith.constant 0 : i32
    %c0_i32_0 = arith.constant 0 : i32
    %c0_i32_1 = arith.constant 0 : i32
    return %c0_i32, %c0_i32_0 : i32, i32
  }
  func.func @transform_1(%arg0: i32, %arg1: i32, %arg2: i32) -> (i32, i32) {
    %c0_i32 = arith.constant 0 : i32
    %c0_i32_0 = arith.constant 0 : i32
    %c0_i32_1 = arith.constant 0 : i32
    return %c0_i32, %c0_i32_0 : i32, i32
  }
  func.func @transform_2(%arg0: i32, %arg1: i32, %arg2: i32) -> (i32, i32) {
    %c0_i32 = arith.constant 0 : i32
    %c0_i32_0 = arith.constant 0 : i32
    %c0_i32_1 = arith.constant 0 : i32
    return %c0_i32, %c0_i32_0 : i32, i32
  }
  func.func @transform_3(%arg0: i32, %arg1: i32, %arg2: i32) -> (i32, i32) {
    %c0_i32 = arith.constant 0 : i32
    %c0_i32_0 = arith.constant 0 : i32
    %c0_i32_1 = arith.constant 0 : i32
    return %c0_i32, %c0_i32_0 : i32, i32
  }
  func.func @transform_4(%arg0: i32, %arg1: i32, %arg2: i32) -> (i32, i32) {
    %c0_i32 = arith.constant 0 : i32
    %c0_i32_0 = arith.constant 0 : i32
    %c0_i32_1 = arith.constant 0 : i32
    return %c0_i32, %c0_i32_0 : i32, i32
  }
  func.func @transform_5(%arg0: i32, %arg1: i32, %arg2: i32) -> (i32, i32) {
    %c0_i32 = arith.constant 0 : i32
    return %arg1, %arg2 : i32, i32
  }
  func.func @transform_6(%arg0: i32, %arg1: i32, %arg2: i32) -> (i32, i32) {
    %c0_i32 = arith.constant 0 : i32
    %c0_i32_0 = arith.constant 0 : i32
    return %arg1, %c0_i32 : i32, i32
  }
}

</mosaic_0001>

<llo_original>
// kernel: gat_forward.1
$region0: #{gat_forward.1}
  #allocation0 [shape = 'u32[]', space=smem, size = 0x4, offset = 0x4, fixed_abs, tag = 'smem constant byte address 0x4 - core index']
  #allocation1 [shape = 'u32[144,128]{1,0:T(1,128)}', space=vmem, size = 0x12000, scoped, tag = 'internal scratch']
  #allocation2 [shape = 'bf16[16,128]{1,0:T(16,128)(2,1)}', space=vmem, size = 0x1000, scoped, tag = 'scratch operand']
  #allocation3 [shape = 'f32[1,16]{1,0:T(1,128)}', space=vmem, size = 0x200, scoped, tag = 'scratch operand']
  #allocation4 [shape = 'bf16[16,128]{1,0:T(16,128)(2,1)}', space=vmem, size = 0x1000, scoped, tag = 'scratch operand']
  #allocation5 [shape = 'f32[16,1]{1,0:T(8,128)}', space=vmem, size = 0x2000, scoped, tag = 'scratch operand']
  #allocation6 [shape = 'f32[16,1]{1,0:T(8,128)}', space=vmem, size = 0x2000, scoped, tag = 'scratch operand']
  #allocation7 [shape = 'f32[16,128]{1,0:T(8,128)}', space=vmem, size = 0x2000, scoped, tag = 'scratch operand']
  %s0 = inlined_call_operand.vmem [shape: bf16[16,8], index: 0, kind: input, shape index: {}]
  %s1 = inlined_call_operand.vmem [shape: bf16[8,128], index: 1, kind: input, shape index: {}]
  %s2 = inlined_call_operand.vmem [shape: f32[1,128], index: 2, kind: input, shape index: {}]
  %s3 = inlined_call_operand.vmem [shape: bf16[128,128], index: 3, kind: input, shape index: {}]
  %s4 = inlined_call_operand.vmem [shape: f32[1,128], index: 4, kind: input, shape index: {}]
  %s5 = inlined_call_operand.vmem [shape: s8[16,16], index: 5, kind: input, shape index: {}]
  %s6 = inlined_call_operand.vmem [shape: f32[16,128], index: 6, kind: output, shape index: {}]
  %s7 = sld [smem:[#allocation0]]
  $region77: #{gat_forward.1} parent=0
    _
  %s9 = ssub.s32 1, %s7
  %s10 = scalar_select 0, %s9, %s7
  loop: start=0, step=1, limit=4
  $region2: #{gat_forward.1} parent=0 // loop_pre_header
    _
  $region3: #{gat_forward.1} parent=0 // loop_header
    %s12 = sphi 0, %s16
    %p13 = scmp.ge.s32.totalorder %s12, 4
    %s19 = sphi 0, %s38
    %s20 = sphi 0, %s34
    %s21 = sphi 0, %s30
    %s22 = sphi 0, %s19
    %s23 = sphi 0, %s20
    %s24 = sphi 0, %s21
    %s25 = sphi 0, %s22
    %s26 = sphi 0, %s23
    %s27 = sphi 0, %s24
    %s39 = sphi 0, %s39
    %s41 = sphi 0, %s39
    %s42 = sphi 0, %s41
    %s56 = sphi 0, %s42
    %s60 = sphi 0, %s60
    %s62 = sphi 0, %s60
    %s63 = sphi 0, %s62
    %s77 = sphi 0, %s63
    %s81 = sphi 0, %s81
    %s83 = sphi 0, %s81
    %s84 = sphi 0, %s83
    %s98 = sphi 0, %s84
    %s102 = sphi 0, %s102
    %s104 = sphi 0, %s102
    %s105 = sphi 0, %s104
    %s119 = sphi 0, %s105
    %s123 = sphi 0, %s123
    %s125 = sphi 0, %s123
    %s126 = sphi 0, %s125
    %s140 = sphi 0, %s126
    %s148 = sphi 0, %s150
    %s151 = sphi 0, %s148
    %s152 = sphi 0, %s151
    %s168 = sphi 0, %s152
    %s174 = sphi 0, %s176
    %s177 = sphi 0, %s174
    %s178 = sphi 0, %s177
    %s194 = sphi 0, %s178
  $region4: #{gat_forward.1} parent=0 // loop_header_branch
    %15 = sbr.rel (%p13) target = $region8
  $region5: #{gat_forward.1} parent=0 // loop_body
    %s17 = ssub.s32 %s12, 1
    %s18 = ssub.s32 %s12, 2
    %s28 = sadd.s32 1, %s21
    %p29 = scmp.ge.s32.totalorder %s28, 1
    %s30 = scalar_select %p29, 0, %s28
    %s31 = sadd.s32 1, %s20
    %s32 = scalar_select %p29, %s31, %s20
    %p33 = scmp.ge.s32.totalorder %s32, 1
    %s34 = scalar_select %p33, 0, %s32
    %s35 = sadd.s32 1, %s19
    %s36 = scalar_select %p33, %s35, %s19
    %p37 = scmp.ge.s32.totalorder %s36, 2
    %s38 = scalar_select %p37, 0, %s36
    %s40 = sadd.s32 %s39, 1
    %p43 = scmp.eq.s32.totalorder %s12, 1
    %p44 = scmp.ne.s32.totalorder %s39, %s41
    %p45 = scmp.eq.s32.totalorder %s12, 0
    %p46 = por %p44, %p45
    %p47 = scmp.ne.s32.totalorder %s39, %s41
    %p48 = scmp.eq.s32.totalorder %s17, 1
    %p49 = por %p47, %p48
    %p50 = scmp.ne.s32.totalorder %s41, %s42
    %p51 = scmp.eq.s32.totalorder %s17, 0
    %p52 = por %p50, %p51
    %p53 = scmp.ne.s32.totalorder %s41, %s42
    %p54 = scmp.eq.s32.totalorder %s18, 1
    %p55 = por %p53, %p54
    %p57 = scmp.ne.s32.totalorder %s42, %s56
    %p58 = scmp.eq.s32.totalorder %s18, 0
    %p59 = por %p57, %p58
    %s61 = sadd.s32 %s60, 1
    %p64 = scmp.eq.s32.totalorder %s12, 1
    %p65 = scmp.ne.s32.totalorder %s60, %s62
    %p66 = scmp.eq.s32.totalorder %s12, 0
    %p67 = por %p65, %p66
    %p68 = scmp.ne.s32.totalorder %s60, %s62
    %p69 = scmp.eq.s32.totalorder %s17, 1
    %p70 = por %p68, %p69
    %p71 = scmp.ne.s32.totalorder %s62, %s63
    %p72 = scmp.eq.s32.totalorder %s17, 0
    %p73 = por %p71, %p72
    %p74 = scmp.ne.s32.totalorder %s62, %s63
    %p75 = scmp.eq.s32.totalorder %s18, 1
    %p76 = por %p74, %p75
    %p78 = scmp.ne.s32.totalorder %s63, %s77
    %p79 = scmp.eq.s32.totalorder %s18, 0
    %p80 = por %p78, %p79
    %s82 = sadd.s32 %s81, 1
    %p85 = scmp.eq.s32.totalorder %s12, 1
    %p86 = scmp.ne.s32.totalorder %s81, %s83
    %p87 = scmp.eq.s32.totalorder %s12, 0
    %p88 = por %p86, %p87
    %p89 = scmp.ne.s32.totalorder %s81, %s83
    %p90 = scmp.eq.s32.totalorder %s17, 1
    %p91 = por %p89, %p90
    %p92 = scmp.ne.s32.totalorder %s83, %s84
    %p93 = scmp.eq.s32.totalorder %s17, 0
    %p94 = por %p92, %p93
    %p95 = scmp.ne.s32.totalorder %s83, %s84
    %p96 = scmp.eq.s32.totalorder %s18, 1
    %p97 = por %p95, %p96
    %p99 = scmp.ne.s32.totalorder %s84, %s98
    %p100 = scmp.eq.s32.totalorder %s18, 0
    %p101 = por %p99, %p100
    %s103 = sadd.s32 %s102, 1
    %p106 = scmp.eq.s32.totalorder %s12, 1
    %p107 = scmp.ne.s32.totalorder %s102, %s104
    %p108 = scmp.eq.s32.totalorder %s12, 0
    %p109 = por %p107, %p108
    %p110 = scmp.ne.s32.totalorder %s102, %s104
    %p111 = scmp.eq.s32.totalorder %s17, 1
    %p112 = por %p110, %p111
    %p113 = scmp.ne.s32.totalorder %s104, %s105
    %p114 = scmp.eq.s32.totalorder %s17, 0
    %p115 = por %p113, %p114
    %p116 = scmp.ne.s32.totalorder %s104, %s105
    %p117 = scmp.eq.s32.totalorder %s18, 1
    %p118 = por %p116, %p117
    %p120 = scmp.ne.s32.totalorder %s105, %s119
    %p121 = scmp.eq.s32.totalorder %s18, 0
    %p122 = por %p120, %p121
    %s124 = sadd.s32 %s123, 1
    %p127 = scmp.eq.s32.totalorder %s12, 1
    %p128 = scmp.ne.s32.totalorder %s123, %s125
    %p129 = scmp.eq.s32.totalorder %s12, 0
    %p130 = por %p128, %p129
    %p131 = scmp.ne.s32.totalorder %s123, %s125
    %p132 = scmp.eq.s32.totalorder %s17, 1
    %p133 = por %p131, %p132
    %p134 = scmp.ne.s32.totalorder %s125, %s126
    %p135 = scmp.eq.s32.totalorder %s17, 0
    %p136 = por %p134, %p135
    %p137 = scmp.ne.s32.totalorder %s125, %s126
    %p138 = scmp.eq.s32.totalorder %s18, 1
    %p139 = por %p137, %p138
    %p141 = scmp.ne.s32.totalorder %s126, %s140
    %p142 = scmp.eq.s32.totalorder %s18, 0
    %p143 = por %p141, %p142
    %s144 = ssub.s32 %s20, %s34
    %s145 = ssub.s32 %s21, %s30
    %s146 = sor.u32 %s144, %s145
    %p147 = scmp.eq.s32.totalorder %s146, 0
    %s149 = sadd.s32 %s148, 1
    %s150 = scalar_select %p147, %s148, %s149
    %p153 = pneg %p147
    %p154 = scmp.eq.s32.totalorder %s12, 1
    %p155 = por %p153, %p154
    %p156 = scmp.ne.s32.totalorder %s148, %s151
    %p157 = scmp.eq.s32.totalorder %s12, 0
    %p158 = por %p156, %p157
    %p159 = scmp.ne.s32.totalorder %s148, %s151
    %p160 = scmp.eq.s32.totalorder %s17, 1
    %p161 = por %p159, %p160
    %p162 = scmp.ne.s32.totalorder %s151, %s152
    %p163 = scmp.eq.s32.totalorder %s17, 0
    %p164 = por %p162, %p163
    %p165 = scmp.ne.s32.totalorder %s151, %s152
    %p166 = scmp.eq.s32.totalorder %s18, 1
    %p167 = por %p165, %p166
    %p169 = scmp.ne.s32.totalorder %s152, %s168
    %p170 = scmp.eq.s32.totalorder %s18, 0
    %p171 = por %p169, %p170
    %s172 = ssub.s32 %s20, %s34
    %p173 = scmp.eq.s32.totalorder %s172, 0
    %s175 = sadd.s32 %s174, 1
    %s176 = scalar_select %p173, %s174, %s175
    %p179 = pneg %p173
    %p180 = scmp.eq.s32.totalorder %s12, 1
    %p181 = por %p179, %p180
    %p182 = scmp.ne.s32.totalorder %s174, %s177
    %p183 = scmp.eq.s32.totalorder %s12, 0
    %p184 = por %p182, %p183
    %p185 = scmp.ne.s32.totalorder %s174, %s177
    %p186 = scmp.eq.s32.totalorder %s17, 1
    %p187 = por %p185, %p186
    %p188 = scmp.ne.s32.totalorder %s177, %s178
    %p189 = scmp.eq.s32.totalorder %s17, 0
    %p190 = por %p188, %p189
    %p191 = scmp.ne.s32.totalorder %s177, %s178
    %p192 = scmp.eq.s32.totalorder %s18, 1
    %p193 = por %p191, %p192
    %p195 = scmp.ne.s32.totalorder %s178, %s194
    %p196 = scmp.eq.s32.totalorder %s18, 0
    %p197 = por %p195, %p196
    %p198 = scmp.le.s32.totalorder 1, %s12
    %p199 = scmp.lt.s32.totalorder %s12, 3
    %p200 = pnand %p198, %p199
    %p201 = pneg %p200
    // Predicated region
    $region9: #{gat_forward.1} parent=5 // pred_check
      _
    $region10: #{gat_forward.1} parent=5 // pred_check_branch
      %203 = sbr.rel (%p200) target = $region12
    $region11: #{gat_forward.1} parent=5 // pred_region
      %s204 = ssub.s32 %s12, 1
      // Predicated region
      $region13: #{gat_forward.1} parent=11 // pred_check
        %p205 = pneg %p52
      $region14: #{gat_forward.1} parent=11 // pred_check_branch
        %207 = sbr.rel (%p205) target = $region16
      $region15: #{gat_forward.1} parent=11 // pred_region
        _
      $region16: #{gat_forward.1} parent=11 // pred_fallthru
        _
      // Predicated region
      $region17: #{gat_forward.1} parent=11 // pred_check
        %p208 = pneg %p73
      $region18: #{gat_forward.1} parent=11 // pred_check_branch
        %210 = sbr.rel (%p208) target = $region20
      $region19: #{gat_forward.1} parent=11 // pred_region
        _
      $region20: #{gat_forward.1} parent=11 // pred_fallthru
        _
      // Predicated region
      $region21: #{gat_forward.1} parent=11 // pred_check
        %p211 = pneg %p94
      $region22: #{gat_forward.1} parent=11 // pred_check_branch
        %213 = sbr.rel (%p211) target = $region24
      $region23: #{gat_forward.1} parent=11 // pred_region
        _
      $region24: #{gat_forward.1} parent=11 // pred_fallthru
        _
      // Predicated region
      $region25: #{gat_forward.1} parent=11 // pred_check
        %p214 = pneg %p115
      $region26: #{gat_forward.1} parent=11 // pred_check_branch
        %216 = sbr.rel (%p214) target = $region28
      $region27: #{gat_forward.1} parent=11 // pred_region
        _
      $region28: #{gat_forward.1} parent=11 // pred_fallthru
        _
      // Predicated region
      $region29: #{gat_forward.1} parent=11 // pred_check
        %p217 = pneg %p136
      $region30: #{gat_forward.1} parent=11 // pred_check_branch
        %219 = sbr.rel (%p217) target = $region32
      $region31: #{gat_forward.1} parent=11 // pred_region
        _
      $region32: #{gat_forward.1} parent=11 // pred_fallthru
        _
      // Predicated region
      $region33: #{gat_forward.1} parent=11 // pred_check
        %p220 = pneg %p164
      $region34: #{gat_forward.1} parent=11 // pred_check_branch
        %222 = sbr.rel (%p220) target = $region36
      $region35: #{gat_forward.1} parent=11 // pred_region
        %s223 = smul.u32 2, %s23
        %p224 = scmp.lt.s32.totalorder %s223, 1
        %s225 = scalar_select %p224, %s223, 1
        %p226 = scmp.lt.s32.totalorder %s24, 0
        %s227 = scalar_select %p226, %s24, 0
        %s228 = sadd.s32 %s227, %s225
        %s229 = smul.addr %s228, 2
        %s230 = scalar_lea.vmem %s5, %s229
        %s231 = smul.u32 2, %s23
      $region36: #{gat_forward.1} parent=11 // pred_fallthru
        _
    $region12: #{gat_forward.1} parent=5 // pred_fallthru
      _
    %p232 = scmp.lt.s32.totalorder %s12, 2
    // Predicated region
    $region37: #{gat_forward.1} parent=5 // pred_check
      %p233 = pneg %p232
    $region38: #{gat_forward.1} parent=5 // pred_check_branch
      %235 = sbr.rel (%p233) target = $region40
    $region39: #{gat_forward.1} parent=5 // pred_region
      _
    $region40: #{gat_forward.1} parent=5 // pred_fallthru
      _
    %p236 = scmp.le.s32.totalorder 1, %s12
    %p237 = scmp.lt.s32.totalorder %s12, 3
    %p238 = pnand %p236, %p237
    %p239 = pneg %p238
    // Predicated region
    $region41: #{gat_forward.1} parent=5 // pred_check
      _
    $region42: #{gat_forward.1} parent=5 // pred_check_branch
      %241 = sbr.rel (%p238) target = $region44
    $region43: #{gat_forward.1} parent=5 // pred_region
      %s242 = ssub.s32 %s12, 1
      %p243 = pneg %p52
      %p244 = pneg %p49
      %p245 = pneg %p73
      %p246 = pneg %p70
      %p247 = pneg %p94
      %p248 = pneg %p91
      %p249 = pneg %p115
      %p250 = pneg %p112
      %p251 = pneg %p136
      %p252 = pneg %p133
      %s253 = smul.u32 2, %s23
      %p254 = scmp.lt.s32.totalorder %s253, 1
      %s255 = scalar_select %p254, %s253, 1
      %p256 = scmp.lt.s32.totalorder %s24, 0
      %s257 = scalar_select %p256, %s24, 0
      %s258 = sadd.s32 %s257, %s255
      %s259 = smul.addr %s258, 2
      %s260 = scalar_lea.vmem %s5, %s259
      %p261 = pneg %p164
      %p262 = pneg %p161
      %p263 = pneg %p190
      %p264 = pneg %p187
      %s265 = smul.u32 2, %s23
      %p266 = scmp.lt.s32.totalorder %s265, 1
      %s267 = scalar_select %p266, %s265, 1
      %s268 = smul.addr %s267, 8
      %s269 = scalar_lea.vmem %s6, %s268
      %s270 = smul.u32 2, %s23
      %p271 = scmp.lt.s32.totalorder %s270, 1
      %s272 = scalar_select %p271, %s270, 1
      %p273 = scmp.lt.s32.totalorder %s24, 0
      %s274 = scalar_select %p273, %s24, 0
      %s275 = sadd.s32 %s274, %s272
      %s276 = smul.addr %s275, 2
      %s277 = scalar_lea.vmem %s5, %s276
      %s278 = smul.u32 2, %s23
      %s279 = smul.u32 2, %s23
      %p280 = scmp.lt.s32.totalorder %s279, 1
      %s281 = scalar_select %p280, %s279, 1
      %s282 = smul.addr %s281, 8
      %s283 = scalar_lea.vmem %s6, %s282
      %s284 = smul.u32 2, %s23
      %p288 = scmp.eq.s32.totalorder %s23, 0
      %p289 = scmp.eq.s32.totalorder %s24, 0
      %p290 = pnand %p288, %p289
      %p291 = pneg %p290
      %s292 = smul.u32 %s23, 16
      %s293 = smul.u32 %s24, 16
      %p294 = scmp.eq.s32.totalorder %s22, 0
      %p295 = pnand %p294, %p291
      %p296 = pneg %p295
      // Predicated region
      $region45: #{gat_forward.1} parent=43 // pred_check
        _
      $region46: #{gat_forward.1} parent=43 // pred_check_branch
        %298 = sbr.rel (%p295) target = $region48
      $region47: #{gat_forward.1} parent=43 // pred_region
        %v299 = vld [vmem:[%s0] sm:$0xf]
        %v300 = vld [vmem:[%s0 + $0x4] sm:$0xf]
        %v301 = vld [vmem:[%s1] sm:$0xf]
        %v304 = vunpack.c.l.b16 %v299
        %v305 = vunpack.c.l.b16 %v300
        %v306 = vpack.c.b16 %v305, %v304
        %vm307 = vcmask 64512
        %v309 = vsel %vm307, %v306, 0
        %vm311 = vcmask 1043456
        %v313 = vsel %vm311, %v301, 0
        %315 = vmatprep.subr.bf16.mxu0 0
        %316 = vmatpush1.bf16.msra.mxu0 %v313
        %317 = vmatprep.subr.bf16.mxu0 0
        %318 = vmatpush1.bf16.msra.mxu0 0
        %319 = vmatprep.subr.bf16.mxu0 0
        %320 = vmatpush1.bf16.msra.mxu0 0
        %321 = vmatprep.subr.bf16.mxu0 0
        %322 = vmatpush1.bf16.msra.mxu0 0
        %323 = vmatprep.subr.bf16.mxu0 0
        %324 = vmatpush1.bf16.msra.mxu0 0
        %325 = vmatprep.subr.bf16.mxu0 0
        %326 = vmatpush1.bf16.msra.mxu0 0
        %327 = vmatprep.subr.bf16.mxu0 0
        %328 = vmatpush1.bf16.msra.mxu0 0
        %329 = vmatprep.subr.bf16.mxu0 0
        %330 = vmatpush1.bf16.msra.mxu0 0
        %331 = vmatprep.subr.bf16.mxu0 0
        %332 = vmatpush1.bf16.msra.mxu0 0
        %333 = vmatprep.subr.bf16.mxu0 0
        %334 = vmatpush1.bf16.msra.mxu0 0
        %335 = vmatprep.subr.bf16.mxu0 0
        %336 = vmatpush1.bf16.msra.mxu0 0
        %337 = vmatprep.subr.bf16.mxu0 0
        %338 = vmatpush1.bf16.msra.mxu0 0
        %339 = vmatprep.subr.bf16.mxu0 0
        %340 = vmatpush1.bf16.msra.mxu0 0
        %341 = vmatprep.subr.bf16.mxu0 0
        %342 = vmatpush1.bf16.msra.mxu0 0
        %343 = vmatprep.subr.bf16.mxu0 0
        %344 = vmatpush1.bf16.msra.mxu0 0
        %345 = vmatprep.subr.bf16.mxu0 0
        %346 = vmatpush1.bf16.msra.mxu0 0
        %347 = vmatprep.mubr.bf16.mxu0 0
        %348 = vmatmul.mubr.bf16.gmra.mrb[0].mxu0 %v309
        %v349 = vpop.f32.mrb[0].mxu0
        %v350 = vadd.f32 0.0, %v349
        %v351 = vpop.f32.mrb[0].mxu0
        %v352 = vpop.f32.mrb[0].mxu0
        %v353 = vadd.f32 0.0, %v352
        %v354 = vpop.f32.mrb[0].mxu0
        %355 = vdwg.mxu0
        %v356 = vlaneseq
        %v357 = vand.u32 %v356, 127
        %vm358 = vcmp.eq.s32.totalorder %v357, 126
        %v359 = vsel %vm358, 1, 0
        %v360 = vcvt.s32.f32 %v359
        %361 = vmatprep.subr.mxu0 0.0
        %362 = vmatpush1.xpose.msra.mxu0 %v350
        %363 = vmatprep.subr.mxu0 0.0
        %364 = vmatpush1.xpose.msra.mxu0 %v353
        %365 = vmatprep.subr.mxu0 0.0
        %366 = vmatpush1.xpose.msra.mxu0 0.0
        %367 = vmatprep.subr.mxu0 0.0
        %368 = vmatpush1.xpose.msra.mxu0 0.0
        %369 = vmatprep.subr.mxu0 0.0
        %370 = vmatpush1.xpose.msra.mxu0 0.0
        %371 = vmatprep.subr.mxu0 0.0
        %372 = vmatpush1.xpose.msra.mxu0 0.0
        %373 = vmatprep.subr.mxu0 0.0
        %374 = vmatpush1.xpose.msra.mxu0 0.0
        %375 = vmatprep.subr.mxu0 0.0
        %376 = vmatpush1.xpose.msra.mxu0 0.0
        %377 = vmatprep.subr.mxu0 0.0
        %378 = vmatpush1.xpose.msra.mxu0 0.0
        %379 = vmatprep.subr.mxu0 0.0
        %380 = vmatpush1.xpose.msra.mxu0 0.0
        %381 = vmatprep.subr.mxu0 0.0
        %382 = vmatpush1.xpose.msra.mxu0 0.0
        %383 = vmatprep.subr.mxu0 0.0
        %384 = vmatpush1.xpose.msra.mxu0 0.0
        %385 = vmatprep.subr.mxu0 0.0
        %386 = vmatpush1.xpose.msra.mxu0 0.0
        %387 = vmatprep.subr.mxu0 0.0
        %388 = vmatpush1.xpose.msra.mxu0 0.0
        %389 = vmatprep.subr.mxu0 0.0
        %390 = vmatpush1.xpose.msra.mxu0 0.0
        %391 = vmatprep.subr.mxu0 0.0
        %392 = vmatpush1.xpose.msra.mxu0 0.0
        %393 = vmatprep.subr.mxu0 0.0
        %394 = vmatpush1.xpose.msra.mxu0 0.0
        %395 = vmatprep.subr.mxu0 0.0
        %396 = vmatpush1.xpose.msra.mxu0 0.0
        %397 = vmatprep.subr.mxu0 0.0
        %398 = vmatpush1.xpose.msra.mxu0 0.0
        %399 = vmatprep.subr.mxu0 0.0
        %400 = vmatpush1.xpose.msra.mxu0 0.0
        %401 = vmatprep.subr.mxu0 0.0
        %402 = vmatpush1.xpose.msra.mxu0 0.0
        %403 = vmatprep.subr.mxu0 0.0
        %404 = vmatpush1.xpose.msra.mxu0 0.0
        %405 = vmatprep.subr.mxu0 0.0
        %406 = vmatpush1.xpose.msra.mxu0 0.0
        %407 = vmatprep.subr.mxu0 0.0
        %408 = vmatpush1.xpose.msra.mxu0 0.0
        %409 = vmatprep.subr.mxu0 0.0
        %410 = vmatpush1.xpose.msra.mxu0 0.0
        %411 = vmatprep.subr.mxu0 0.0
        %412 = vmatpush1.xpose.msra.mxu0 0.0
        %413 = vmatprep.subr.mxu0 0.0
        %414 = vmatpush1.xpose.msra.mxu0 0.0
        %415 = vmatprep.subr.mxu0 0.0
        %416 = vmatpush1.xpose.msra.mxu0 0.0
        %417 = vmatprep.subr.mxu0 0.0
        %418 = vmatpush1.xpose.msra.mxu0 0.0
        %419 = vmatprep.subr.mxu0 0.0
        %420 = vmatpush1.xpose.msra.mxu0 0.0
        %421 = vmatprep.subr.mxu0 0.0
        %422 = vmatpush1.xpose.msra.mxu0 0.0
        %423 = vmatprep.subr.mxu0 0.0
        %424 = vmatpush1.xpose.msra.mxu0 0.0
        %425 = vmatprep.mubr.f32.mxu0 0.0
        %426 = vmatmul.mubr.f32.gmra.mrb[0].mxu0 %v360
        %v427 = vpop.f32.mrb[0].mxu0
        %v428 = vadd.f32 0.0, %v427
        %v429 = vpop.f32.mrb[0].mxu0
        %430 = vdwg.mxu0
        %vm431 = vcmask 122880
        %432 = vst.msk [vmem:[#allocation3] sm:$0x1] %vm431, %v428
        %vm433 = vcmp.eq.s32.totalorder %v357, 125
        %v434 = vsel %vm433, 1.0, %v350
        %v435 = vsel %vm433, 1.0, %v353
        %v436 = vpack.c.bf16 %v435, %v434
        %437 = vst [vmem:[#allocation2] sm:$0xff] %v436
      $region48: #{gat_forward.1} parent=43 // pred_fallthru
        _
      %p438 = scmp.eq.s32.totalorder %s22, 1
      %p439 = pnand %p438, %p291
      %p440 = pneg %p439
      // Predicated region
      $region49: #{gat_forward.1} parent=43 // pred_check
        _
      $region50: #{gat_forward.1} parent=43 // pred_check_branch
        %442 = sbr.rel (%p439) target = $region52
      $region51: #{gat_forward.1} parent=43 // pred_region
        %v443 = vld [vmem:[#allocation4] sm:$0xff]
        %v444 = vld [vmem:[%s3] sm:$0xf]
        %v445 = vld [vmem:[%s3 + $0x4] sm:$0xf]
        %v446 = vld [vmem:[%s3 + $0x8] sm:$0xf]
        %v447 = vld [vmem:[%s3 + $0xc] sm:$0xf]
        %v448 = vld [vmem:[%s3 + $0x10] sm:$0xf]
        %v449 = vld [vmem:[%s3 + $0x14] sm:$0xf]
        %v450 = vld [vmem:[%s3 + $0x18] sm:$0xf]
        %v451 = vld [vmem:[%s3 + $0x1c] sm:$0xf]
        %v452 = vld [vmem:[%s3 + $0x20] sm:$0xf]
        %v453 = vld [vmem:[%s3 + $0x24] sm:$0xf]
        %v454 = vld [vmem:[%s3 + $0x28] sm:$0xf]
        %v455 = vld [vmem:[%s3 + $0x2c] sm:$0xf]
        %v456 = vld [vmem:[%s3 + $0x30] sm:$0xf]
        %v457 = vld [vmem:[%s3 + $0x34] sm:$0xf]
        %v458 = vld [vmem:[%s3 + $0x38] sm:$0xf]
        %v459 = vld [vmem:[%s3 + $0x3c] sm:$0xf]
        %v476 = vunpack.c.l.b16 %v444
        %v477 = vunpack.c.l.b16 %v445
        %v478 = vunpack.c.l.b16 %v446
        %v479 = vunpack.c.l.b16 %v447
        %v480 = vunpack.c.l.b16 %v448
        %v481 = vunpack.c.l.b16 %v449
        %v482 = vunpack.c.l.b16 %v450
        %v483 = vunpack.c.l.b16 %v451
        %v484 = vunpack.c.l.b16 %v452
        %v485 = vunpack.c.l.b16 %v453
        %v486 = vunpack.c.l.b16 %v454
        %v487 = vunpack.c.l.b16 %v455
        %v488 = vunpack.c.l.b16 %v456
        %v489 = vunpack.c.l.b16 %v457
        %v490 = vunpack.c.l.b16 %v458
        %v491 = vunpack.c.l.b16 %v459
        %v492 = vpack.c.b16 %v477, %v476
        %v493 = vpack.c.b16 %v479, %v478
        %v494 = vpack.c.b16 %v481, %v480
        %v495 = vpack.c.b16 %v483, %v482
        %v496 = vpack.c.b16 %v485, %v484
        %v497 = vpack.c.b16 %v487, %v486
        %v498 = vpack.c.b16 %v489, %v488
        %v499 = vpack.c.b16 %v491, %v490
        %508 = vmatprep.subr.bf16.mxu0 0
        %509 = vmatpush1.bf16.msra.mxu0 %v492
        %510 = vmatprep.subr.bf16.mxu0 0
        %511 = vmatpush1.bf16.msra.mxu0 %v493
        %512 = vmatprep.subr.bf16.mxu0 0
        %513 = vmatpush1.bf16.msra.mxu0 %v494
        %514 = vmatprep.subr.bf16.mxu0 0
        %515 = vmatpush1.bf16.msra.mxu0 %v495
        %516 = vmatprep.subr.bf16.mxu0 0
        %517 = vmatpush1.bf16.msra.mxu0 %v496
        %518 = vmatprep.subr.bf16.mxu0 0
        %519 = vmatpush1.bf16.msra.mxu0 %v497
        %520 = vmatprep.subr.bf16.mxu0 0
        %521 = vmatpush1.bf16.msra.mxu0 %v498
        %522 = vmatprep.subr.bf16.mxu0 0
        %523 = vmatpush1.bf16.msra.mxu0 %v499
        %524 = vmatprep.subr.bf16.mxu0 0
        %525 = vmatpush1.bf16.msra.mxu0 0
        %526 = vmatprep.subr.bf16.mxu0 0
        %527 = vmatpush1.bf16.msra.mxu0 0
        %528 = vmatprep.subr.bf16.mxu0 0
        %529 = vmatpush1.bf16.msra.mxu0 0
        %530 = vmatprep.subr.bf16.mxu0 0
        %531 = vmatpush1.bf16.msra.mxu0 0
        %532 = vmatprep.subr.bf16.mxu0 0
        %533 = vmatpush1.bf16.msra.mxu0 0
        %534 = vmatprep.subr.bf16.mxu0 0
        %535 = vmatpush1.bf16.msra.mxu0 0
        %536 = vmatprep.subr.bf16.mxu0 0
        %537 = vmatpush1.bf16.msra.mxu0 0
        %538 = vmatprep.subr.bf16.mxu0 0
        %539 = vmatpush1.bf16.msra.mxu0 0
        %540 = vmatprep.mubr.bf16.mxu0 0
        %541 = vmatmul.mubr.bf16.gmra.mrb[0].mxu0 %v443
        %v542 = vpop.f32.mrb[0].mxu0
        %v543 = vadd.f32 0.0, %v542
        %v544 = vpop.f32.mrb[0].mxu0
        %v545 = vpop.f32.mrb[0].mxu0
        %v546 = vadd.f32 0.0, %v545
        %v547 = vpop.f32.mrb[0].mxu0
        %548 = vdwg.mxu0
        %v549 = vlaneseq
        %v550 = vand.u32 %v549, 127
        %vm551 = vcmp.eq.s32.totalorder %v550, 126
        %v552 = vsel %vm551, 1, 0
        %v553 = vcvt.s32.f32 %v552
        %554 = vmatprep.subr.mxu0 0.0
        %555 = vmatpush1.xpose.msra.mxu0 %v543
        %556 = vmatprep.subr.mxu0 0.0
        %557 = vmatpush1.xpose.msra.mxu0 %v546
        %558 = vmatprep.subr.mxu0 0.0
        %559 = vmatpush1.xpose.msra.mxu0 0.0
        %560 = vmatprep.subr.mxu0 0.0
        %561 = vmatpush1.xpose.msra.mxu0 0.0
        %562 = vmatprep.subr.mxu0 0.0
        %563 = vmatpush1.xpose.msra.mxu0 0.0
        %564 = vmatprep.subr.mxu0 0.0
        %565 = vmatpush1.xpose.msra.mxu0 0.0
        %566 = vmatprep.subr.mxu0 0.0
        %567 = vmatpush1.xpose.msra.mxu0 0.0
        %568 = vmatprep.subr.mxu0 0.0
        %569 = vmatpush1.xpose.msra.mxu0 0.0
        %570 = vmatprep.subr.mxu0 0.0
        %571 = vmatpush1.xpose.msra.mxu0 0.0
        %572 = vmatprep.subr.mxu0 0.0
        %573 = vmatpush1.xpose.msra.mxu0 0.0
        %574 = vmatprep.subr.mxu0 0.0
        %575 = vmatpush1.xpose.msra.mxu0 0.0
        %576 = vmatprep.subr.mxu0 0.0
        %577 = vmatpush1.xpose.msra.mxu0 0.0
        %578 = vmatprep.subr.mxu0 0.0
        %579 = vmatpush1.xpose.msra.mxu0 0.0
        %580 = vmatprep.subr.mxu0 0.0
        %581 = vmatpush1.xpose.msra.mxu0 0.0
        %582 = vmatprep.subr.mxu0 0.0
        %583 = vmatpush1.xpose.msra.mxu0 0.0
        %584 = vmatprep.subr.mxu0 0.0
        %585 = vmatpush1.xpose.msra.mxu0 0.0
        %586 = vmatprep.subr.mxu0 0.0
        %587 = vmatpush1.xpose.msra.mxu0 0.0
        %588 = vmatprep.subr.mxu0 0.0
        %589 = vmatpush1.xpose.msra.mxu0 0.0
        %590 = vmatprep.subr.mxu0 0.0
        %591 = vmatpush1.xpose.msra.mxu0 0.0
        %592 = vmatprep.subr.mxu0 0.0
        %593 = vmatpush1.xpose.msra.mxu0 0.0
        %594 = vmatprep.subr.mxu0 0.0
        %595 = vmatpush1.xpose.msra.mxu0 0.0
        %596 = vmatprep.subr.mxu0 0.0
        %597 = vmatpush1.xpose.msra.mxu0 0.0
        %598 = vmatprep.subr.mxu0 0.0
        %599 = vmatpush1.xpose.msra.mxu0 0.0
        %600 = vmatprep.subr.mxu0 0.0
        %601 = vmatpush1.xpose.msra.mxu0 0.0
        %602 = vmatprep.subr.mxu0 0.0
        %603 = vmatpush1.xpose.msra.mxu0 0.0
        %604 = vmatprep.subr.mxu0 0.0
        %605 = vmatpush1.xpose.msra.mxu0 0.0
        %606 = vmatprep.subr.mxu0 0.0
        %607 = vmatpush1.xpose.msra.mxu0 0.0
        %608 = vmatprep.subr.mxu0 0.0
        %609 = vmatpush1.xpose.msra.mxu0 0.0
        %610 = vmatprep.subr.mxu0 0.0
        %611 = vmatpush1.xpose.msra.mxu0 0.0
        %612 = vmatprep.subr.mxu0 0.0
        %613 = vmatpush1.xpose.msra.mxu0 0.0
        %614 = vmatprep.subr.mxu0 0.0
        %615 = vmatpush1.xpose.msra.mxu0 0.0
        %616 = vmatprep.subr.mxu0 0.0
        %617 = vmatpush1.xpose.msra.mxu0 0.0
        %618 = vmatprep.mubr.f32.mxu0 0.0
        %619 = vmatmul.mubr.f32.gmra.mrb[0].mxu0 %v553
        %v620 = vpop.f32.mrb[0].mxu0
        %v621 = vadd.f32 0.0, %v620
        %v622 = vpop.f32.mrb[0].mxu0
        %623 = vdwg.mxu0
        %vm624 = vcmask 122880
        %625 = vst.msk [vmem:[#allocation3] sm:$0x1] %vm624, %v621
        %vm626 = vcmp.eq.s32.totalorder %v550, 125
        %v627 = vsel %vm626, 1.0, %v543
        %v628 = vsel %vm626, 1.0, %v546
        %v629 = vpack.c.bf16 %v628, %v627
        %630 = vst [vmem:[#allocation2] sm:$0xff] %v629
      $region52: #{gat_forward.1} parent=43 // pred_fallthru
        _
      // Predicated region
      $region53: #{gat_forward.1} parent=43 // pred_check
        %p631 = pneg %p289
      $region54: #{gat_forward.1} parent=43 // pred_check_branch
        %633 = sbr.rel (%p631) target = $region56
      $region55: #{gat_forward.1} parent=43 // pred_region
        %vm634 = vcmask 7168
        %635 = vst.msk [vmem:[#allocation6] sm:$0xff] %vm634, -1e+30
        %636 = vst.msk [vmem:[#allocation6 + $0x8] sm:$0xff] %vm634, -1e+30
        %637 = vst [vmem:[#allocation7] sm:$0xff] 0.0
        %638 = vst [vmem:[#allocation7 + $0x8] sm:$0xff] 0.0
        %s639 = sshra.s32 %s292, 4
        %s640 = sand.u32 %s292, 15
        %s641 = smul.addr %s639, 8
        %s642 = scalar_lea.vmem [#allocation2], %s641
        %v643 = vld [vmem:[%s642] sm:$0xff]
        %v644 = vunpack.c.l.bf16 %v643
        %v645 = vunpack.c.h.bf16 %v643
        %648 = vrot.lane.b32.xlu0 %v644, 1
        %v649 = vpop.permute.xlu0 %648
        %650 = vrot.lane.b32.xlu0 %v645, 1
        %v651 = vpop.permute.xlu0 %650
        %654 = vst.msk [vmem:[#allocation5] sm:$0xff] %vm634, %v649
        %655 = vst.msk [vmem:[#allocation5 + $0x8] sm:$0xff] %vm634, %v651
      $region56: #{gat_forward.1} parent=43 // pred_fallthru
        _
      %v656 = vld [vmem:[#allocation3] sm:$0x1]
      %v657 = vld [vmem:[#allocation5] sm:$0xff]
      %v658 = vld [vmem:[#allocation5 + $0x8] sm:$0xff]
      %660 = vset.pattern.permute.xlu0 0
      %661 = vperm.xlu0 %660, %v657
      %v662 = vpop.permute.xlu0 %661
      %665 = vset.pattern.permute.xlu0 0
      %666 = vperm.xlu0 %665, %v658
      %v667 = vpop.permute.xlu0 %666
      %v670 = vlaneseq
      %v671 = vshrl.u32 %v670, 7
      %v672 = vsub.s32 0, %v671
      %v673 = vrot.slane %v656, %v672
      %v675 = vadd.f32 %v662, %v673
      %v676 = vadd.f32 %v667, %v673
      %v677 = vmul.f32 %v675, 0.2
      %v678 = vmul.f32 %v676, 0.2
      %v679 = vmax.f32 %v675, %v677
      %v680 = vmax.f32 %v676, %v678
      %v681 = vld [vmem:[%s277] sm:$0x3]
      %v682 = vld [vmem:[%s277 + $0x2] sm:$0x3]
      %vm683 = vnez %v681
      %vm684 = vnez %v682
      %v685 = vsel %vm683, 16843009, 0
      %v686 = vsel %vm684, 16843009, 0
      %v687 = vunpack.c.0.s8 %v685
      %v688 = vunpack.c.0.s8 %v686
      %vm689 = vcmp.ne.s32.totalorder %v687, 0
      %vm690 = vcmp.ne.s32.totalorder %v688, 0
      %v691 = vsel %vm689, %v679, -1e+30
      %v692 = vsel %vm690, %v680, -1e+30
      %v693 = vld [vmem:[#allocation6] sm:$0xff]
      %v694 = vld [vmem:[#allocation6 + $0x8] sm:$0xff]
      %vm695 = vcmask 130048
      %v696 = vsel %vm695, %v691, -inf
      %697 = vmax.xlane.f32.xlu0 %v696
      %v698 = vpop.xlane.xlu0 %697
      %v699 = vsel %vm695, %v692, -inf
      %700 = vmax.xlane.f32.xlu0 %v699
      %v701 = vpop.xlane.xlu0 %700
      %v702 = vmax.f32 %v693, %v698
      %v703 = vmax.f32 %v694, %v701
      %v704 = vsub.f32 %v693, %v702
      %v705 = vsub.f32 %v694, %v703
      %v706 = vmul.f32 %v704, 1.442695
      %v707 = vpow.pop %v706
      %v708 = vmul.f32 %v705, 1.442695
      %v709 = vpow.pop %v708
      %711 = vset.pattern.permute.xlu0 0
      %712 = vperm.xlu0 %711, %v702
      %v713 = vpop.permute.xlu0 %712
      %716 = vset.pattern.permute.xlu0 0
      %717 = vperm.xlu0 %716, %v703
      %v718 = vpop.permute.xlu0 %717
      %v720 = vsub.f32 %v691, %v713
      %v721 = vsub.f32 %v692, %v718
      %v722 = vmul.f32 %v720, 1.442695
      %v723 = vpow.pop %v722
      %v724 = vmul.f32 %v721, 1.442695
      %v725 = vpow.pop %v724
      %s726 = sshra.s32 %s293, 4
      %s727 = sand.u32 %s293, 15
      %s728 = smul.addr %s726, 8
      %s729 = scalar_lea.vmem [#allocation2], %s728
      %v730 = vld [vmem:[%s729] sm:$0xff]
      %v731 = vld [vmem:[#allocation7] sm:$0xff]
      %v732 = vld [vmem:[#allocation7 + $0x8] sm:$0xff]
      %734 = vset.pattern.permute.xlu0 0
      %735 = vperm.xlu0 %734, %v707
      %v736 = vpop.permute.xlu0 %735
      %739 = vset.pattern.permute.xlu0 0
      %740 = vperm.xlu0 %739, %v709
      %v741 = vpop.permute.xlu0 %740
      %v743 = vmul.f32 %v736, %v731
      %v744 = vmul.f32 %v741, %v732
      %v745 = vpack.c.bf16 %v725, %v723
      %v747 = vsel %vm695, %v745, 0
      %749 = vmatprep.subr.bf16.mxu0 0
      %750 = vmatpush1.bf16.msra.mxu0 %v730
      %751 = vmatprep.subr.bf16.mxu0 0
      %752 = vmatpush1.bf16.msra.mxu0 0
      %753 = vmatprep.subr.bf16.mxu0 0
      %754 = vmatpush1.bf16.msra.mxu0 0
      %755 = vmatprep.subr.bf16.mxu0 0
      %756 = vmatpush1.bf16.msra.mxu0 0
      %757 = vmatprep.subr.bf16.mxu0 0
      %758 = vmatpush1.bf16.msra.mxu0 0
      %759 = vmatprep.subr.bf16.mxu0 0
      %760 = vmatpush1.bf16.msra.mxu0 0
      %761 = vmatprep.subr.bf16.mxu0 0
      %762 = vmatpush1.bf16.msra.mxu0 0
      %763 = vmatprep.subr.bf16.mxu0 0
      %764 = vmatpush1.bf16.msra.mxu0 0
      %765 = vmatprep.subr.bf16.mxu0 0
      %766 = vmatpush1.bf16.msra.mxu0 0
      %767 = vmatprep.subr.bf16.mxu0 0
      %768 = vmatpush1.bf16.msra.mxu0 0
      %769 = vmatprep.subr.bf16.mxu0 0
      %770 = vmatpush1.bf16.msra.mxu0 0
      %771 = vmatprep.subr.bf16.mxu0 0
      %772 = vmatpush1.bf16.msra.mxu0 0
      %773 = vmatprep.subr.bf16.mxu0 0
      %774 = vmatpush1.bf16.msra.mxu0 0
      %775 = vmatprep.subr.bf16.mxu0 0
      %776 = vmatpush1.bf16.msra.mxu0 0
      %777 = vmatprep.subr.bf16.mxu0 0
      %778 = vmatpush1.bf16.msra.mxu0 0
      %779 = vmatprep.subr.bf16.mxu0 0
      %780 = vmatpush1.bf16.msra.mxu0 0
      %781 = vmatprep.mubr.bf16.mxu0 0
      %782 = vmatmul.mubr.bf16.gmra.mrb[0].mxu0 %v747
      %v783 = vpop.f32.mrb[0].mxu0
      %v784 = vadd.f32 0.0, %v783
      %v785 = vpop.f32.mrb[0].mxu0
      %v786 = vpop.f32.mrb[0].mxu0
      %v787 = vadd.f32 0.0, %v786
      %v788 = vpop.f32.mrb[0].mxu0
      %789 = vdwg.mxu0
      %v790 = vadd.f32 %v743, %v784
      %v791 = vadd.f32 %v744, %v787
      %792 = vst [vmem:[#allocation7] sm:$0xff] %v790
      %793 = vst [vmem:[#allocation7 + $0x8] sm:$0xff] %v791
      %vm794 = vcmask 7168
      %795 = vst.msk [vmem:[#allocation6] sm:$0xff] %vm794, %v702
      %796 = vst.msk [vmem:[#allocation6 + $0x8] sm:$0xff] %vm794, %v703
      %p797 = pnand %p289, %p294
      %p798 = pneg %p797
      // Predicated region
      $region57: #{gat_forward.1} parent=43 // pred_check
        _
      $region58: #{gat_forward.1} parent=43 // pred_check_branch
        %800 = sbr.rel (%p797) target = $region60
      $region59: #{gat_forward.1} parent=43 // pred_region
        %v801 = vld [vmem:[#allocation7] sm:$0xff]
        %v802 = vld [vmem:[#allocation7 + $0x8] sm:$0xff]
        %v803 = vmax.f32 %v801, 1e-30
        %v804 = vmax.f32 %v802, 1e-30
        %v805 = vrcp.pop %v803
        %v806 = vrcp.pop %v804
        %808 = vset.pattern.permute.xlu0 125
        %809 = vperm.xlu0 %808, %v805
        %v810 = vpop.permute.xlu0 %809
        %813 = vset.pattern.permute.xlu0 125
        %814 = vperm.xlu0 %813, %v806
        %v815 = vpop.permute.xlu0 %814
        %v817 = vmul.f32 %v801, %v810
        %v818 = vmul.f32 %v802, %v815
        %v819 = vld [vmem:[%s2] sm:$0x1]
        %v821 = vlaneseq
        %v822 = vshrl.u32 %v821, 7
        %v823 = vsub.s32 0, %v822
        %v824 = vrot.slane %v819, %v823
        %v826 = vadd.f32 %v817, %v824
        %v827 = vadd.f32 %v818, %v824
        %v828 = vmax.f32 %v826, 0.0
        %v829 = vmax.f32 %v827, 0.0
        %v830 = vpack.c.bf16 %v829, %v828
        %s831 = sshra.s32 %s292, 4
        %s832 = sand.u32 %s292, 15
        %s833 = smul.addr %s831, 8
        %s834 = scalar_lea.vmem [#allocation4], %s833
        %835 = vst [vmem:[%s834] sm:$0xff] %v830
        %836 = vst [vmem:[%s283] sm:$0xff] %v828
        %837 = vst [vmem:[%s283 + $0x8] sm:$0xff] %v829
      $region60: #{gat_forward.1} parent=43 // pred_fallthru
        _
      %p838 = pnand %p289, %p438
      %p839 = pneg %p838
      // Predicated region
      $region61: #{gat_forward.1} parent=43 // pred_check
        _
      $region62: #{gat_forward.1} parent=43 // pred_check_branch
        %841 = sbr.rel (%p838) target = $region64
      $region63: #{gat_forward.1} parent=43 // pred_region
        %v842 = vld [vmem:[#allocation7] sm:$0xff]
        %v843 = vld [vmem:[#allocation7 + $0x8] sm:$0xff]
        %v844 = vmax.f32 %v842, 1e-30
        %v845 = vmax.f32 %v843, 1e-30
        %v846 = vrcp.pop %v844
        %v847 = vrcp.pop %v845
        %849 = vset.pattern.permute.xlu0 125
        %850 = vperm.xlu0 %849, %v846
        %v851 = vpop.permute.xlu0 %850
        %854 = vset.pattern.permute.xlu0 125
        %855 = vperm.xlu0 %854, %v847
        %v856 = vpop.permute.xlu0 %855
        %v858 = vmul.f32 %v842, %v851
        %v859 = vmul.f32 %v843, %v856
        %v860 = vld [vmem:[%s4] sm:$0x1]
        %v862 = vlaneseq
        %v863 = vshrl.u32 %v862, 7
        %v864 = vsub.s32 0, %v863
        %v865 = vrot.slane %v860, %v864
        %v867 = vadd.f32 %v858, %v865
        %v868 = vadd.f32 %v859, %v865
        %v869 = vlaneseq
        %v870 = vand.u32 %v869, 127
        %vm871 = vcmp.lt.s32.totalorder %v870, 4
        %v872 = vsel %vm871, %v867, -1e+30
        %v873 = vsel %vm871, %v868, -1e+30
        %874 = vmax.xlane.f32.xlu0 %v872
        %v875 = vpop.xlane.xlu0 %874
        %876 = vmax.xlane.f32.xlu0 %v873
        %v877 = vpop.xlane.xlu0 %876
        %v878 = vsub.f32 %v867, %v875
        %v879 = vsub.f32 %v868, %v877
        %v880 = vmul.f32 %v878, 1.442695
        %v881 = vpow.pop %v880
        %v882 = vmul.f32 %v879, 1.442695
        %v883 = vpow.pop %v882
        %v884 = vsel %vm871, %v881, 0.0
        %v885 = vsel %vm871, %v883, 0.0
        %886 = vadd.xlane.f32.xlu0 %v884
        %v887 = vpop.xlane.xlu0 %886
        %888 = vadd.xlane.f32.xlu0 %v885
        %v889 = vpop.xlane.xlu0 %888
        %v890 = vlog2.pop %v887
        %v891 = vmul.f32 %v890, 0.6931472
        %v892 = vlog2.pop %v889
        %v893 = vmul.f32 %v892, 0.6931472
        %v894 = vsub.f32 %v878, %v891
        %v895 = vsub.f32 %v879, %v893
        %896 = vst [vmem:[%s283] sm:$0xff] %v894
        %897 = vst [vmem:[%s283 + $0x8] sm:$0xff] %v895
      $region64: #{gat_forward.1} parent=43 // pred_fallthru
        _
      %s898 = smul.u32 2, %s23
      %p899 = scmp.lt.s32.totalorder %s898, 1
      %s900 = scalar_select %p899, %s898, 1
      %s901 = smul.addr %s900, 8
      %s902 = scalar_lea.vmem %s6, %s901
      // Predicated region
      $region65: #{gat_forward.1} parent=43 // pred_check
        %p903 = pneg %p187
      $region66: #{gat_forward.1} parent=43 // pred_check_branch
        %905 = sbr.rel (%p903) target = $region68
      $region67: #{gat_forward.1} parent=43 // pred_region
        %s906 = smul.u32 2, %s23
      $region68: #{gat_forward.1} parent=43 // pred_fallthru
        _
      // Predicated region
      $region69: #{gat_forward.1} parent=43 // pred_check
        %p907 = pneg %p187
      $region70: #{gat_forward.1} parent=43 // pred_check_branch
        %909 = sbr.rel (%p907) target = $region72
      $region71: #{gat_forward.1} parent=43 // pred_region
        %s910 = smul.u32 2, %s23
        %p911 = scmp.lt.s32.totalorder %s910, 1
        %s912 = scalar_select %p911, %s910, 1
        %s913 = smul.addr %s912, 8
        %s914 = scalar_lea.vmem %s6, %s913
      $region72: #{gat_forward.1} parent=43 // pred_fallthru
        _
    $region44: #{gat_forward.1} parent=5 // pred_fallthru
      _
    %p915 = scmp.le.s32.totalorder 2, %s12
    // Predicated region
    $region73: #{gat_forward.1} parent=5 // pred_check
      %p916 = pneg %p915
    $region74: #{gat_forward.1} parent=5 // pred_check_branch
      %918 = sbr.rel (%p916) target = $region76
    $region75: #{gat_forward.1} parent=5 // pred_region
      %s919 = ssub.s32 %s12, 2
    $region76: #{gat_forward.1} parent=5 // pred_fallthru
      _
  $region6: #{gat_forward.1} parent=0 // loop_footer
    %s16 = sadd.s32 1, %s12
  $region7: #{gat_forward.1} parent=0 // loop_footer_branch
    %11 = sbr.rel target = $region3
  $region8: #{gat_forward.1} parent=0 // loop_exit
    _

</llo_original>
